<compile_context>
chip_gen: v7x
topology: tpu7x:2x2x1
jax: 0.10.0
libtpu: 0.0.40
codegen_flags: <defaults>
</compile_context>

<pallas_src>
import jax
import jax.numpy as jnp
from jax.experimental import pallas as pl
from jax.experimental.pallas import tpu as pltpu


def _round_up(x, m):
    return ((x + m - 1) // m) * m


def simple_nn_kernel(xin_ref, xctx_ref, w0a_ref, w0b_ref, b0_ref,
                     w1_ref, b1_ref, w2_ref, b2_ref, out_ref):
    """Fused MLP on one batch tile.

    relu(relu([xin | xctx] @ W0 + b0) @ W1 + b1) @ W2 + b2,
    with the concat expressed as xin@W0a + xctx@W0b. All matmuls accumulate
    in f32 on the MXU; intermediates stay in vregs (no scratch refs).
    """
    h = jnp.dot(xin_ref[...], w0a_ref[...], preferred_element_type=jnp.float32)
    h = h + jnp.dot(xctx_ref[...], w0b_ref[...],
                    preferred_element_type=jnp.float32)
    h = jnp.maximum(h + b0_ref[...], 0.0)          # bias (1,H) broadcasts

    h = jnp.dot(h.astype(w1_ref.dtype), w1_ref[...],
                preferred_element_type=jnp.float32)
    h = jnp.maximum(h + b1_ref[...], 0.0)

    y = jnp.dot(h.astype(w2_ref.dtype), w2_ref[...],
                preferred_element_type=jnp.float32)
    y = y + b2_ref[...]
    out_ref[...] = y.astype(out_ref.dtype)


def simple_nn_forward(inputs, context, params, *, batch_tile=256,
                      compute_dtype=None):
    """Run the fused-MLP Pallas kernel.

    params: [(W0, b0), (W1, b1), (W2, b2)] with W stored as [in, out]
            (i.e. transposed vs. nn.Linear.weight), b as (1, out).
    compute_dtype: optionally cast operands (e.g. jnp.bfloat16 on v6e/v7x);
            accumulation stays f32 inside the kernel.
    """
    (w0, b0), (w1, b1), (w2, b2) = params
    batch, d_in = inputs.shape
    d_ctx = context.shape[1]
    h0 = w0.shape[1]
    h1 = w1.shape[1]
    out_dim = w2.shape[1]

    # Fold the concat into the kernel: split W0 by input/context rows.
    w0a = w0[:d_in]
    w0b = w0[d_in:]

    # Lane-dense output: pad the final layer to a multiple of 128 columns.
    out_pad = _round_up(out_dim, 128)
    w2p = jnp.pad(w2, ((0, 0), (0, out_pad - out_dim)))
    b2p = jnp.pad(b2, ((0, 0), (0, out_pad - out_dim)))

    # Optional low-precision operands (f32 accumulation preserved).
    if compute_dtype is not None:
        cast = lambda a: a.astype(compute_dtype)
        inputs, context = cast(inputs), cast(context)
        w0a, w0b, w1, w2p = cast(w0a), cast(w0b), cast(w1), cast(w2p)

    # Batch tiling. TB is a multiple of 8 sublanes; small batches collapse to
    # a single tile, large batches use batch_tile-row tiles (weights resident).
    TB = batch_tile if batch >= batch_tile else _round_up(batch, 8)
    padded_batch = _round_up(batch, TB)
    if padded_batch != batch:
        pad = padded_batch - batch
        inputs = jnp.pad(inputs, ((0, pad), (0, 0)))
        context = jnp.pad(context, ((0, pad), (0, 0)))

    grid = (padded_batch // TB,)

    itemsize = lambda a: int(a.size) * a.dtype.itemsize
    flops = 2 * padded_batch * (d_in * h0 + d_ctx * h0 + h0 * h1 + h1 * out_pad)
    bytes_accessed = (itemsize(inputs) + itemsize(context)
                      + sum(itemsize(a) for a in (w0a, w0b, b0, w1, b1, w2p, b2p))
                      + padded_batch * out_pad * 4)

    # Weights/biases: full-extent blocks, same block for every grid step
    # -> stay resident in VMEM across iterations.
    resident = lambda a: pl.BlockSpec(a.shape, lambda i: (0, 0))

    out = pl.pallas_call(
        simple_nn_kernel,
        out_shape=jax.ShapeDtypeStruct((padded_batch, out_pad), jnp.float32),
        grid=grid,
        in_specs=[
            pl.BlockSpec((TB, d_in), lambda i: (i, 0)),
            pl.BlockSpec((TB, d_ctx), lambda i: (i, 0)),
            resident(w0a), resident(w0b), resident(b0),
            resident(w1), resident(b1),
            resident(w2p), resident(b2p),
        ],
        out_specs=pl.BlockSpec((TB, out_pad), lambda i: (i, 0)),
        compiler_params=pltpu.CompilerParams(
            dimension_semantics=("parallel",)),
        cost_estimate=pl.CostEstimate(flops=flops, transcendentals=0,
                                      bytes_accessed=bytes_accessed),
    )(inputs, context, w0a, w0b, b0, w1, b1, w2p, b2p)

    # Strip batch padding and the lane padding of the output features.
    return out[:batch, :out_dim]


def init_params(key, input_dim, hidden_features, output_dim, dtype=jnp.float32):
    """Deterministic init mimicking nn.Linear's U(-1/sqrt(fan_in), +...).

    Weight layout: [in_features, out_features]; bias: [1, out_features].
    """
    dims = [input_dim] + list(hidden_features) + [output_dim]
    params = []
    for i in range(len(dims) - 1):
        key, kw, kb = jax.random.split(key, 3)
        bound = 1.0 / jnp.sqrt(dims[i])
        w = jax.random.uniform(kw, (dims[i], dims[i + 1]),
                               minval=-bound, maxval=bound, dtype=dtype)
        b = jax.random.uniform(kb, (1, dims[i + 1]),
                               minval=-bound, maxval=bound, dtype=dtype)
        params.append((w, b))
    return params


def simple_nn_reference(inputs, context, params):
    """Pure-JAX reference matching the PyTorch forward."""
    x = jnp.concatenate([inputs, context], axis=-1)
    (w0, b0), (w1, b1), (w2, b2) = params
    x = jax.nn.relu(x @ w0 + b0)
    x = jax.nn.relu(x @ w1 + b1)
    return x @ w2 + b2


if __name__ == "__main__":
    # Shapes implied by the module: inputs (B, 8) + context (B, 8) -> 16-dim
    # input, hidden_features=[32, 32], output_dim=8.
    in_feat, ctx_feat = 8, 8
    input_dim = in_feat + ctx_feat
    hidden_features = [32, 32]
    output_dim = 8

    key = jax.random.PRNGKey(0)
    k_in, k_ctx, k_par, k_in2, k_ctx2 = jax.random.split(key, 5)
    params = init_params(k_par, input_dim, hidden_features, output_dim)

    # --- small batch (single tile) -------------------------------------
    batch = 8
    inputs = jax.random.normal(k_in, (batch, in_feat), dtype=jnp.float32)
    context = jax.random.normal(k_ctx, (batch, ctx_feat), dtype=jnp.float32)

    out = jax.block_until_ready(simple_nn_forward(inputs, context, params))
    ref = simple_nn_reference(inputs, context, params)
    assert out.shape == (batch, output_dim)
    assert jnp.allclose(out, ref, atol=1e-5, rtol=1e-5), "mismatch (batch=8)"

    # --- larger, ragged batch (multi-tile grid + padding path) ----------
    batch2 = 1000
    inputs2 = jax.random.normal(k_in2, (batch2, in_feat), dtype=jnp.float32)
    context2 = jax.random.normal(k_ctx2, (batch2, ctx_feat), dtype=jnp.float32)

    out2 = jax.block_until_ready(simple_nn_forward(inputs2, context2, params))
    ref2 = simple_nn_reference(inputs2, context2, params)
    assert out2.shape == (batch2, output_dim)
    assert jnp.allclose(out2, ref2, atol=1e-5, rtol=1e-5), "mismatch (batch=1000)"

    print("KERNEL_OK")
</pallas_src>

<mosaic_0001>
module attributes {stable_mosaic.version = 11 : i64} {
  func.func @simple_nn_kernel(%arg0: i32, %arg1: memref<8x8xf32, #tpu.memory_space<vmem>>, %arg2: memref<8x8xf32, #tpu.memory_space<vmem>>, %arg3: memref<8x32xf32, #tpu.memory_space<vmem>>, %arg4: memref<8x32xf32, #tpu.memory_space<vmem>>, %arg5: memref<1x32xf32, #tpu.memory_space<vmem>>, %arg6: memref<32x32xf32, #tpu.memory_space<vmem>>, %arg7: memref<1x32xf32, #tpu.memory_space<vmem>>, %arg8: memref<32x128xf32, #tpu.memory_space<vmem>>, %arg9: memref<1x128xf32, #tpu.memory_space<vmem>>, %arg10: memref<8x128xf32, #tpu.memory_space<vmem>>) attributes {dimension_semantics = [#tpu.dimension_semantics<parallel>], iteration_bounds = array<i64: 1>, scalar_prefetch = 0 : i64, scratch_operands = 0 : i64, tpu.core_type = #tpu.core_type<tc>, window_params = [{transform_indices = @transform_0, window_bounds = array<i64: 8, 8>}, {transform_indices = @transform_1, window_bounds = array<i64: 8, 8>}, {pipeline_mode = #tpu.pipeline_mode<synchronous>, transform_indices = @transform_2, window_bounds = array<i64: 8, 32>}, {pipeline_mode = #tpu.pipeline_mode<synchronous>, transform_indices = @transform_3, window_bounds = array<i64: 8, 32>}, {pipeline_mode = #tpu.pipeline_mode<synchronous>, transform_indices = @transform_4, window_bounds = array<i64: 1, 32>}, {pipeline_mode = #tpu.pipeline_mode<synchronous>, transform_indices = @transform_5, window_bounds = array<i64: 32, 32>}, {pipeline_mode = #tpu.pipeline_mode<synchronous>, transform_indices = @transform_6, window_bounds = array<i64: 1, 32>}, {pipeline_mode = #tpu.pipeline_mode<synchronous>, transform_indices = @transform_7, window_bounds = array<i64: 32, 128>}, {pipeline_mode = #tpu.pipeline_mode<synchronous>, transform_indices = @transform_8, window_bounds = array<i64: 1, 128>}, {transform_indices = @transform_9, window_bounds = array<i64: 8, 128>}]} {
    %c0 = arith.constant 0 : index
    %c0_0 = arith.constant 0 : index
    %0 = vector.load %arg1[%c0, %c0_0] : memref<8x8xf32, #tpu.memory_space<vmem>>, vector<8x8xf32>
    %c0_1 = arith.constant 0 : index
    %c0_2 = arith.constant 0 : index
    %1 = vector.load %arg3[%c0_1, %c0_2] : memref<8x32xf32, #tpu.memory_space<vmem>>, vector<8x32xf32>
    %cst = arith.constant dense<0.000000e+00> : vector<8x32xf32>
    %2 = tpu.matmul %0, %1, %cst {dimension_numbers = #tpu.dot_dimension_numbers<[1], [0], [0], [1], [0, 0, 1, 1], [], []>} : vector<8x8xf32>, vector<8x32xf32>, vector<8x32xf32> -> vector<8x32xf32>
    %c0_3 = arith.constant 0 : index
    %c0_4 = arith.constant 0 : index
    %3 = vector.load %arg2[%c0_3, %c0_4] : memref<8x8xf32, #tpu.memory_space<vmem>>, vector<8x8xf32>
    %c0_5 = arith.constant 0 : index
    %c0_6 = arith.constant 0 : index
    %4 = vector.load %arg4[%c0_5, %c0_6] : memref<8x32xf32, #tpu.memory_space<vmem>>, vector<8x32xf32>
    %cst_7 = arith.constant dense<0.000000e+00> : vector<8x32xf32>
    %5 = tpu.matmul %3, %4, %cst_7 {dimension_numbers = #tpu.dot_dimension_numbers<[1], [0], [0], [1], [0, 0, 1, 1], [], []>} : vector<8x8xf32>, vector<8x32xf32>, vector<8x32xf32> -> vector<8x32xf32>
    %6 = arith.addf %2, %5 : vector<8x32xf32>
    %c0_8 = arith.constant 0 : index
    %c0_9 = arith.constant 0 : index
    %7 = vector.load %arg5[%c0_8, %c0_9] : memref<1x32xf32, #tpu.memory_space<vmem>>, vector<1x32xf32>
    %8 = vector.broadcast %7 : vector<1x32xf32> to vector<8x32xf32>
    %9 = arith.addf %6, %8 : vector<8x32xf32>
    %cst_10 = arith.constant 0.000000e+00 : f32
    %10 = vector.broadcast %cst_10 : f32 to vector<8x32xf32>
    %11 = arith.maximumf %9, %10 : vector<8x32xf32>
    %c0_11 = arith.constant 0 : index
    %c0_12 = arith.constant 0 : index
    %12 = vector.load %arg6[%c0_11, %c0_12] : memref<32x32xf32, #tpu.memory_space<vmem>>, vector<32x32xf32>
    %cst_13 = arith.constant dense<0.000000e+00> : vector<8x32xf32>
    %13 = tpu.matmul %11, %12, %cst_13 {dimension_numbers = #tpu.dot_dimension_numbers<[1], [0], [0], [1], [0, 0, 1, 1], [], []>} : vector<8x32xf32>, vector<32x32xf32>, vector<8x32xf32> -> vector<8x32xf32>
    %c0_14 = arith.constant 0 : index
    %c0_15 = arith.constant 0 : index
    %14 = vector.load %arg7[%c0_14, %c0_15] : memref<1x32xf32, #tpu.memory_space<vmem>>, vector<1x32xf32>
    %15 = vector.broadcast %14 : vector<1x32xf32> to vector<8x32xf32>
    %16 = arith.addf %13, %15 : vector<8x32xf32>
    %cst_16 = arith.constant 0.000000e+00 : f32
    %17 = vector.broadcast %cst_16 : f32 to vector<8x32xf32>
    %18 = arith.maximumf %16, %17 : vector<8x32xf32>
    %c0_17 = arith.constant 0 : index
    %c0_18 = arith.constant 0 : index
    %19 = vector.load %arg8[%c0_17, %c0_18] : memref<32x128xf32, #tpu.memory_space<vmem>>, vector<32x128xf32>
    %cst_19 = arith.constant dense<0.000000e+00> : vector<8x128xf32>
    %20 = tpu.matmul %18, %19, %cst_19 {dimension_numbers = #tpu.dot_dimension_numbers<[1], [0], [0], [1], [0, 0, 1, 1], [], []>} : vector<8x32xf32>, vector<32x128xf32>, vector<8x128xf32> -> vector<8x128xf32>
    %c0_20 = arith.constant 0 : index
    %c0_21 = arith.constant 0 : index
    %21 = vector.load %arg9[%c0_20, %c0_21] : memref<1x128xf32, #tpu.memory_space<vmem>>, vector<1x128xf32>
    %22 = vector.broadcast %21 : vector<1x128xf32> to vector<8x128xf32>
    %23 = arith.addf %20, %22 : vector<8x128xf32>
    %c0_22 = arith.constant 0 : index
    %c0_23 = arith.constant 0 : index
    %24 = vector.load %arg10[%c0_22, %c0_23] : memref<8x128xf32, #tpu.memory_space<vmem>>, vector<8x128xf32>
    tpu.vector_store %arg10[%c0_22, %c0_23], %23 {strides = array<i32>} : memref<8x128xf32, #tpu.memory_space<vmem>>, vector<8x128xf32>,
    return
  }
  func.func @transform_0(%arg0: i32) -> (i32, i32) {
    %c0_i32 = arith.constant 0 : i32
    %c0_i32_0 = arith.constant 0 : i32
    return %arg0, %c0_i32 : i32, i32
  }
  func.func @transform_1(%arg0: i32) -> (i32, i32) {
    %c0_i32 = arith.constant 0 : i32
    %c0_i32_0 = arith.constant 0 : i32
    return %arg0, %c0_i32 : i32, i32
  }
  func.func @transform_2(%arg0: i32) -> (i32, i32) {
    %c0_i32 = arith.constant 0 : i32
    %c0_i32_0 = arith.constant 0 : i32
    %c0_i32_1 = arith.constant 0 : i32
    return %c0_i32, %c0_i32_0 : i32, i32
  }
  func.func @transform_3(%arg0: i32) -> (i32, i32) {
    %c0_i32 = arith.constant 0 : i32
    %c0_i32_0 = arith.constant 0 : i32
    %c0_i32_1 = arith.constant 0 : i32
    return %c0_i32, %c0_i32_0 : i32, i32
  }
  func.func @transform_4(%arg0: i32) -> (i32, i32) {
    %c0_i32 = arith.constant 0 : i32
    %c0_i32_0 = arith.constant 0 : i32
    %c0_i32_1 = arith.constant 0 : i32
    return %c0_i32, %c0_i32_0 : i32, i32
  }
  func.func @transform_5(%arg0: i32) -> (i32, i32) {
    %c0_i32 = arith.constant 0 : i32
    %c0_i32_0 = arith.constant 0 : i32
    %c0_i32_1 = arith.constant 0 : i32
    return %c0_i32, %c0_i32_0 : i32, i32
  }
  func.func @transform_6(%arg0: i32) -> (i32, i32) {
    %c0_i32 = arith.constant 0 : i32
    %c0_i32_0 = arith.constant 0 : i32
    %c0_i32_1 = arith.constant 0 : i32
    return %c0_i32, %c0_i32_0 : i32, i32
  }
  func.func @transform_7(%arg0: i32) -> (i32, i32) {
    %c0_i32 = arith.constant 0 : i32
    %c0_i32_0 = arith.constant 0 : i32
    %c0_i32_1 = arith.constant 0 : i32
    return %c0_i32, %c0_i32_0 : i32, i32
  }
  func.func @transform_8(%arg0: i32) -> (i32, i32) {
    %c0_i32 = arith.constant 0 : i32
    %c0_i32_0 = arith.constant 0 : i32
    %c0_i32_1 = arith.constant 0 : i32
    return %c0_i32, %c0_i32_0 : i32, i32
  }
  func.func @transform_9(%arg0: i32) -> (i32, i32) {
    %c0_i32 = arith.constant 0 : i32
    %c0_i32_0 = arith.constant 0 : i32
    return %arg0, %c0_i32 : i32, i32
  }
}

</mosaic_0001>

<llo_original>
// kernel: tpu_custom_call.1
$region0: #{tpu_custom_call.1}
  #allocation0 [shape = 'u32[]', space=smem, size = 0x4, offset = 0x4, fixed_abs, tag = 'smem constant byte address 0x4 - core index']
  #allocation1 [shape = 'u32[144,128]{1,0:T(1,128)}', space=vmem, size = 0x12000, scoped, tag = 'internal scratch']
  %s0 = inlined_call_operand.hbm [shape: f32[8,8], index: 0, kind: input, shape index: {}]
  %s1 = inlined_call_operand.hbm [shape: f32[8,8], index: 1, kind: input, shape index: {}]
  %s2 = inlined_call_operand.hbm [shape: f32[8,32], index: 2, kind: input, shape index: {}]
  %s3 = inlined_call_operand.vmem [shape: f32[8,32], index: 3, kind: input, shape index: {}]
  %s4 = inlined_call_operand.vmem [shape: f32[1,32], index: 4, kind: input, shape index: {}]
  %s5 = inlined_call_operand.hbm [shape: f32[32,32], index: 5, kind: input, shape index: {}]
  %s6 = inlined_call_operand.vmem [shape: f32[1,32], index: 6, kind: input, shape index: {}]
  %s7 = inlined_call_operand.hbm [shape: f32[32,128], index: 7, kind: input, shape index: {}]
  %s8 = inlined_call_operand.vmem [shape: f32[1,128], index: 8, kind: input, shape index: {}]
  %s9 = inlined_call_operand.hbm [shape: f32[8,128], index: 9, kind: output, shape index: {}]
  %s10 = sld [smem:[#allocation0]]
  $region66: #{tpu_custom_call.1} parent=0
    _
  %s12 = ssub.s32 1, %s10
  %s13 = scalar_select 0, %s12, %s10
  $region1: #{tpu_custom_call.1} parent=0
    #allocation2 [shape = 'u8[4096]{0}', space=vmem, size = 0x1000, scoped, tag = 'input window, operand 0, single buffered']
    #allocation3 [shape = 's32[1]{0}', space=sflag, size = 0x4, scoped, tag = 'scoped memory for tpu_custom_call.1']
    #allocation4 [shape = 's32[1]{0}', space=sflag, size = 0x4, scoped, tag = 'scoped memory for tpu_custom_call.1']
    #allocation5 [shape = 'u8[4096]{0}', space=vmem, size = 0x1000, scoped, tag = 'input window, operand 1, single buffered']
    #allocation6 [shape = 's32[1]{0}', space=sflag, size = 0x4, scoped, tag = 'scoped memory for tpu_custom_call.1']
    #allocation7 [shape = 'u8[4096]{0}', space=vmem, size = 0x1000, scoped, tag = 'input window, operand 2, single buffered']
    #allocation8 [shape = 'u8[16384]{0}', space=vmem, size = 0x4000, scoped, tag = 'input window, operand 5, single buffered']
    #allocation9 [shape = 's32[1]{0}', space=sflag, size = 0x4, scoped, tag = 'scoped memory for tpu_custom_call.1']
    #allocation10 [shape = 'u8[16384]{0}', space=vmem, size = 0x4000, scoped, tag = 'input window, operand 7, single buffered']
    #allocation11 [shape = 'u8[4096]{0}', space=vmem, size = 0x1000, scoped, tag = 'output window, operand 0, single buffered']
    %14 = vsyncpa [#allocation3], 0
    %15 = vsyncpa [#allocation6], 0
    %16 = vsyncpa [#allocation9], 0
    %17 = vsyncpa [#allocation4], 0
    // Predicated region
    $region2: #{tpu_custom_call.1} parent=1 // pred_check
      _
    $region3: #{tpu_custom_call.1} parent=1 // pred_check_branch
      %19 = sbr.rel (0) target = $region5
    $region4: #{tpu_custom_call.1} parent=1 // pred_region
      %s21 = ssub.s32 128, 128
      %22 = vsyncadd [#allocation3], %s21
      %s24 = sshll.u32 [#allocation2], 4
      %s25 = int_to_ptr.vmem [resolvable:$true] %s24
      %27 = dma.hbm_to_vmem [thread:$0]  %s0, 128, %s25, [#allocation3]
    $region5: #{tpu_custom_call.1} parent=1 // pred_fallthru
      _
    // Predicated region
    $region6: #{tpu_custom_call.1} parent=1 // pred_check
      _
    $region7: #{tpu_custom_call.1} parent=1 // pred_check_branch
      %29 = sbr.rel (0) target = $region9
    $region8: #{tpu_custom_call.1} parent=1 // pred_region
      %s31 = ssub.s32 128, 128
      %32 = vsyncadd [#allocation6], %s31
      %s34 = sshll.u32 [#allocation5], 4
      %s35 = int_to_ptr.vmem [resolvable:$true] %s34
      %37 = dma.hbm_to_vmem [thread:$0]  %s1, 128, %s35, [#allocation6]
    $region9: #{tpu_custom_call.1} parent=1 // pred_fallthru
      _
    // Predicated region
    $region10: #{tpu_custom_call.1} parent=1 // pred_check
      _
    $region11: #{tpu_custom_call.1} parent=1 // pred_check_branch
      %39 = sbr.rel (0) target = $region13
    $region12: #{tpu_custom_call.1} parent=1 // pred_region
      %s41 = ssub.s32 128, 128
      %42 = vsyncadd [#allocation6], %s41
      %s44 = sshll.u32 [#allocation7], 4
      %s45 = int_to_ptr.vmem [resolvable:$true] %s44
      %47 = dma.hbm_to_vmem [thread:$0]  %s2, 128, %s45, [#allocation6]
    $region13: #{tpu_custom_call.1} parent=1 // pred_fallthru
      _
    // Predicated region
    $region14: #{tpu_custom_call.1} parent=1 // pred_check
      _
    $region15: #{tpu_custom_call.1} parent=1 // pred_check_branch
      %49 = sbr.rel (0) target = $region17
    $region16: #{tpu_custom_call.1} parent=1 // pred_region
      _
    $region17: #{tpu_custom_call.1} parent=1 // pred_fallthru
      _
    // Predicated region
    $region18: #{tpu_custom_call.1} parent=1 // pred_check
      _
    $region19: #{tpu_custom_call.1} parent=1 // pred_check_branch
      %51 = sbr.rel (0) target = $region21
    $region20: #{tpu_custom_call.1} parent=1 // pred_region
      _
    $region21: #{tpu_custom_call.1} parent=1 // pred_fallthru
      _
    // Predicated region
    $region22: #{tpu_custom_call.1} parent=1 // pred_check
      _
    $region23: #{tpu_custom_call.1} parent=1 // pred_check_branch
      %53 = sbr.rel (0) target = $region25
    $region24: #{tpu_custom_call.1} parent=1 // pred_region
      %s55 = ssub.s32 512, 512
      %56 = vsyncadd [#allocation9], %s55
      %s57 = sshll.u32 [#allocation8], 4
      %s58 = int_to_ptr.vmem [resolvable:$true] %s57
      %63 = dma.hbm_to_vmem [thread:$0]  %s5, 512, %s58, [#allocation9], 128, 128, 8
    $region25: #{tpu_custom_call.1} parent=1 // pred_fallthru
      _
    // Predicated region
    $region26: #{tpu_custom_call.1} parent=1 // pred_check
      _
    $region27: #{tpu_custom_call.1} parent=1 // pred_check_branch
      %65 = sbr.rel (0) target = $region29
    $region28: #{tpu_custom_call.1} parent=1 // pred_region
      _
    $region29: #{tpu_custom_call.1} parent=1 // pred_fallthru
      _
    // Predicated region
    $region30: #{tpu_custom_call.1} parent=1 // pred_check
      _
    $region31: #{tpu_custom_call.1} parent=1 // pred_check_branch
      %67 = sbr.rel (0) target = $region33
    $region32: #{tpu_custom_call.1} parent=1 // pred_region
      %s69 = ssub.s32 512, 512
      %70 = vsyncadd [#allocation9], %s69
      %s71 = sshll.u32 [#allocation10], 4
      %s72 = int_to_ptr.vmem [resolvable:$true] %s71
      %77 = dma.hbm_to_vmem [thread:$0]  %s7, 512, %s72, [#allocation9], 128, 128, 8
    $region33: #{tpu_custom_call.1} parent=1 // pred_fallthru
      _
    // Predicated region
    $region34: #{tpu_custom_call.1} parent=1 // pred_check
      _
    $region35: #{tpu_custom_call.1} parent=1 // pred_check_branch
      %79 = sbr.rel (0) target = $region37
    $region36: #{tpu_custom_call.1} parent=1 // pred_region
      _
    $region37: #{tpu_custom_call.1} parent=1 // pred_fallthru
      _
    // Predicated region
    $region38: #{tpu_custom_call.1} parent=1 // pred_check
      _
    $region39: #{tpu_custom_call.1} parent=1 // pred_check_branch
      %81 = sbr.rel (0) target = $region41
    $region40: #{tpu_custom_call.1} parent=1 // pred_region
      %82 = dma.done [#allocation3], 128
    $region41: #{tpu_custom_call.1} parent=1 // pred_fallthru
      _
    // Predicated region
    $region42: #{tpu_custom_call.1} parent=1 // pred_check
      _
    $region43: #{tpu_custom_call.1} parent=1 // pred_check_branch
      %84 = sbr.rel (0) target = $region45
    $region44: #{tpu_custom_call.1} parent=1 // pred_region
      %85 = dma.done [#allocation6], 128
    $region45: #{tpu_custom_call.1} parent=1 // pred_fallthru
      _
    // Predicated region
    $region46: #{tpu_custom_call.1} parent=1 // pred_check
      _
    $region47: #{tpu_custom_call.1} parent=1 // pred_check_branch
      %87 = sbr.rel (0) target = $region49
    $region48: #{tpu_custom_call.1} parent=1 // pred_region
      %88 = dma.done [#allocation6], 128
    $region49: #{tpu_custom_call.1} parent=1 // pred_fallthru
      _
    // Predicated region
    $region50: #{tpu_custom_call.1} parent=1 // pred_check
      _
    $region51: #{tpu_custom_call.1} parent=1 // pred_check_branch
      %90 = sbr.rel (0) target = $region53
    $region52: #{tpu_custom_call.1} parent=1 // pred_region
      %91 = dma.done [#allocation9], 512
    $region53: #{tpu_custom_call.1} parent=1 // pred_fallthru
      _
    // Predicated region
    $region54: #{tpu_custom_call.1} parent=1 // pred_check
      _
    $region55: #{tpu_custom_call.1} parent=1 // pred_check_branch
      %93 = sbr.rel (0) target = $region57
    $region56: #{tpu_custom_call.1} parent=1 // pred_region
      %94 = dma.done [#allocation9], 512
    $region57: #{tpu_custom_call.1} parent=1 // pred_fallthru
      _
    %v95 = vld [vmem:[#allocation2] sm:$0xff]
    %v96 = vld [vmem:[#allocation7] sm:$0xff]
    %v97 = vld [vmem:[#allocation5] sm:$0xff]
    %v98 = vld [vmem:[%s3] sm:$0xff]
    %vm99 = vcmask 64512
    %v101 = vsel %vm99, %v97, 0
    %103 = vmatprep.subr.mxu0 0.0
    %104 = vmatpush1.msra.mxu0 %v98
    %105 = vmatprep.subr.mxu0 0.0
    %106 = vmatpush1.msra.mxu0 0.0
    %107 = vmatprep.subr.mxu0 0.0
    %108 = vmatpush1.msra.mxu0 0.0
    %109 = vmatprep.subr.mxu0 0.0
    %110 = vmatpush1.msra.mxu0 0.0
    %111 = vmatprep.subr.mxu0 0.0
    %112 = vmatpush1.msra.mxu0 0.0
    %113 = vmatprep.subr.mxu0 0.0
    %114 = vmatpush1.msra.mxu0 0.0
    %115 = vmatprep.subr.mxu0 0.0
    %116 = vmatpush1.msra.mxu0 0.0
    %117 = vmatprep.subr.mxu0 0.0
    %118 = vmatpush1.msra.mxu0 0.0
    %119 = vmatprep.subr.mxu0 0.0
    %120 = vmatpush1.msra.mxu0 0.0
    %121 = vmatprep.subr.mxu0 0.0
    %122 = vmatpush1.msra.mxu0 0.0
    %123 = vmatprep.subr.mxu0 0.0
    %124 = vmatpush1.msra.mxu0 0.0
    %125 = vmatprep.subr.mxu0 0.0
    %126 = vmatpush1.msra.mxu0 0.0
    %127 = vmatprep.subr.mxu0 0.0
    %128 = vmatpush1.msra.mxu0 0.0
    %129 = vmatprep.subr.mxu0 0.0
    %130 = vmatpush1.msra.mxu0 0.0
    %131 = vmatprep.subr.mxu0 0.0
    %132 = vmatpush1.msra.mxu0 0.0
    %133 = vmatprep.subr.mxu0 0.0
    %134 = vmatpush1.msra.mxu0 0.0
    %135 = vmatprep.subr.mxu0 0.0
    %136 = vmatpush1.msra.mxu0 0.0
    %137 = vmatprep.subr.mxu0 0.0
    %138 = vmatpush1.msra.mxu0 0.0
    %139 = vmatprep.subr.mxu0 0.0
    %140 = vmatpush1.msra.mxu0 0.0
    %141 = vmatprep.subr.mxu0 0.0
    %142 = vmatpush1.msra.mxu0 0.0
    %143 = vmatprep.subr.mxu0 0.0
    %144 = vmatpush1.msra.mxu0 0.0
    %145 = vmatprep.subr.mxu0 0.0
    %146 = vmatpush1.msra.mxu0 0.0
    %147 = vmatprep.subr.mxu0 0.0
    %148 = vmatpush1.msra.mxu0 0.0
    %149 = vmatprep.subr.mxu0 0.0
    %150 = vmatpush1.msra.mxu0 0.0
    %151 = vmatprep.subr.mxu0 0.0
    %152 = vmatpush1.msra.mxu0 0.0
    %153 = vmatprep.subr.mxu0 0.0
    %154 = vmatpush1.msra.mxu0 0.0
    %155 = vmatprep.subr.mxu0 0.0
    %156 = vmatpush1.msra.mxu0 0.0
    %157 = vmatprep.subr.mxu0 0.0
    %158 = vmatpush1.msra.mxu0 0.0
    %159 = vmatprep.subr.mxu0 0.0
    %160 = vmatpush1.msra.mxu0 0.0
    %161 = vmatprep.subr.mxu0 0.0
    %162 = vmatpush1.msra.mxu0 0.0
    %163 = vmatprep.subr.mxu0 0.0
    %164 = vmatpush1.msra.mxu0 0.0
    %165 = vmatprep.subr.mxu0 0.0
    %166 = vmatpush1.msra.mxu0 0.0
    %167 = vmatprep.mubr.f32.mxu0 0.0
    %168 = vmatmul.mubr.f32.gmra.mrb[0].mxu0 %v101
    %v169 = vpop.f32.mrb[0].mxu0
    %v170 = vadd.f32 0.0, %v169
    %v171 = vpop.f32.mrb[0].mxu0
    %172 = vdwg.mxu0
    %v174 = vsel %vm99, %v95, 0
    %176 = vmatprep.subr.mxu0 0.0
    %177 = vmatpush1.msra.mxu0 %v96
    %178 = vmatprep.subr.mxu0 0.0
    %179 = vmatpush1.msra.mxu0 0.0
    %180 = vmatprep.subr.mxu0 0.0
    %181 = vmatpush1.msra.mxu0 0.0
    %182 = vmatprep.subr.mxu0 0.0
    %183 = vmatpush1.msra.mxu0 0.0
    %184 = vmatprep.subr.mxu0 0.0
    %185 = vmatpush1.msra.mxu0 0.0
    %186 = vmatprep.subr.mxu0 0.0
    %187 = vmatpush1.msra.mxu0 0.0
    %188 = vmatprep.subr.mxu0 0.0
    %189 = vmatpush1.msra.mxu0 0.0
    %190 = vmatprep.subr.mxu0 0.0
    %191 = vmatpush1.msra.mxu0 0.0
    %192 = vmatprep.subr.mxu0 0.0
    %193 = vmatpush1.msra.mxu0 0.0
    %194 = vmatprep.subr.mxu0 0.0
    %195 = vmatpush1.msra.mxu0 0.0
    %196 = vmatprep.subr.mxu0 0.0
    %197 = vmatpush1.msra.mxu0 0.0
    %198 = vmatprep.subr.mxu0 0.0
    %199 = vmatpush1.msra.mxu0 0.0
    %200 = vmatprep.subr.mxu0 0.0
    %201 = vmatpush1.msra.mxu0 0.0
    %202 = vmatprep.subr.mxu0 0.0
    %203 = vmatpush1.msra.mxu0 0.0
    %204 = vmatprep.subr.mxu0 0.0
    %205 = vmatpush1.msra.mxu0 0.0
    %206 = vmatprep.subr.mxu0 0.0
    %207 = vmatpush1.msra.mxu0 0.0
    %208 = vmatprep.subr.mxu0 0.0
    %209 = vmatpush1.msra.mxu0 0.0
    %210 = vmatprep.subr.mxu0 0.0
    %211 = vmatpush1.msra.mxu0 0.0
    %212 = vmatprep.subr.mxu0 0.0
    %213 = vmatpush1.msra.mxu0 0.0
    %214 = vmatprep.subr.mxu0 0.0
    %215 = vmatpush1.msra.mxu0 0.0
    %216 = vmatprep.subr.mxu0 0.0
    %217 = vmatpush1.msra.mxu0 0.0
    %218 = vmatprep.subr.mxu0 0.0
    %219 = vmatpush1.msra.mxu0 0.0
    %220 = vmatprep.subr.mxu0 0.0
    %221 = vmatpush1.msra.mxu0 0.0
    %222 = vmatprep.subr.mxu0 0.0
    %223 = vmatpush1.msra.mxu0 0.0
    %224 = vmatprep.subr.mxu0 0.0
    %225 = vmatpush1.msra.mxu0 0.0
    %226 = vmatprep.subr.mxu0 0.0
    %227 = vmatpush1.msra.mxu0 0.0
    %228 = vmatprep.subr.mxu0 0.0
    %229 = vmatpush1.msra.mxu0 0.0
    %230 = vmatprep.subr.mxu0 0.0
    %231 = vmatpush1.msra.mxu0 0.0
    %232 = vmatprep.subr.mxu0 0.0
    %233 = vmatpush1.msra.mxu0 0.0
    %234 = vmatprep.subr.mxu0 0.0
    %235 = vmatpush1.msra.mxu0 0.0
    %236 = vmatprep.subr.mxu0 0.0
    %237 = vmatpush1.msra.mxu0 0.0
    %238 = vmatprep.subr.mxu0 0.0
    %239 = vmatpush1.msra.mxu0 0.0
    %240 = vmatprep.mubr.f32.mxu0 0.0
    %241 = vmatmul.mubr.f32.gmra.mrb[0].mxu0 %v174
    %v242 = vpop.f32.mrb[0].mxu0
    %v243 = vadd.f32 %v170, %v242
    %v244 = vpop.f32.mrb[0].mxu0
    %245 = vdwg.mxu0
    %v246 = vld [vmem:[%s4] sm:$0x1]
    %v248 = vlaneseq
    %v249 = vshrl.u32 %v248, 7
    %v250 = vsub.s32 0, %v249
    %v251 = vrot.slane %v246, %v250
    %v253 = vadd.f32 %v243, %v251
    %v254 = vmax.f32 %v253, 0.0
    %v255 = vld [vmem:[#allocation8] sm:$0xff]
    %v256 = vld [vmem:[#allocation8 + $0x8] sm:$0xff]
    %v257 = vld [vmem:[#allocation8 + $0x10] sm:$0xff]
    %v258 = vld [vmem:[#allocation8 + $0x18] sm:$0xff]
    %v259 = vld [vmem:[%s6] sm:$0x1]
    %v261 = vlaneseq
    %v262 = vshrl.u32 %v261, 7
    %v263 = vsub.s32 0, %v262
    %v264 = vrot.slane %v259, %v263
    %vm266 = vcmask 261120
    %v268 = vsel %vm266, %v254, 0
    %270 = vmatprep.subr.mxu0 0.0
    %271 = vmatpush1.msra.mxu0 %v255
    %272 = vmatprep.subr.mxu0 0.0
    %273 = vmatpush1.msra.mxu0 %v256
    %274 = vmatprep.subr.mxu0 0.0
    %275 = vmatpush1.msra.mxu0 %v257
    %276 = vmatprep.subr.mxu0 0.0
    %277 = vmatpush1.msra.mxu0 %v258
    %278 = vmatprep.subr.mxu0 0.0
    %279 = vmatpush1.msra.mxu0 0.0
    %280 = vmatprep.subr.mxu0 0.0
    %281 = vmatpush1.msra.mxu0 0.0
    %282 = vmatprep.subr.mxu0 0.0
    %283 = vmatpush1.msra.mxu0 0.0
    %284 = vmatprep.subr.mxu0 0.0
    %285 = vmatpush1.msra.mxu0 0.0
    %286 = vmatprep.subr.mxu0 0.0
    %287 = vmatpush1.msra.mxu0 0.0
    %288 = vmatprep.subr.mxu0 0.0
    %289 = vmatpush1.msra.mxu0 0.0
    %290 = vmatprep.subr.mxu0 0.0
    %291 = vmatpush1.msra.mxu0 0.0
    %292 = vmatprep.subr.mxu0 0.0
    %293 = vmatpush1.msra.mxu0 0.0
    %294 = vmatprep.subr.mxu0 0.0
    %295 = vmatpush1.msra.mxu0 0.0
    %296 = vmatprep.subr.mxu0 0.0
    %297 = vmatpush1.msra.mxu0 0.0
    %298 = vmatprep.subr.mxu0 0.0
    %299 = vmatpush1.msra.mxu0 0.0
    %300 = vmatprep.subr.mxu0 0.0
    %301 = vmatpush1.msra.mxu0 0.0
    %302 = vmatprep.subr.mxu0 0.0
    %303 = vmatpush1.msra.mxu0 0.0
    %304 = vmatprep.subr.mxu0 0.0
    %305 = vmatpush1.msra.mxu0 0.0
    %306 = vmatprep.subr.mxu0 0.0
    %307 = vmatpush1.msra.mxu0 0.0
    %308 = vmatprep.subr.mxu0 0.0
    %309 = vmatpush1.msra.mxu0 0.0
    %310 = vmatprep.subr.mxu0 0.0
    %311 = vmatpush1.msra.mxu0 0.0
    %312 = vmatprep.subr.mxu0 0.0
    %313 = vmatpush1.msra.mxu0 0.0
    %314 = vmatprep.subr.mxu0 0.0
    %315 = vmatpush1.msra.mxu0 0.0
    %316 = vmatprep.subr.mxu0 0.0
    %317 = vmatpush1.msra.mxu0 0.0
    %318 = vmatprep.subr.mxu0 0.0
    %319 = vmatpush1.msra.mxu0 0.0
    %320 = vmatprep.subr.mxu0 0.0
    %321 = vmatpush1.msra.mxu0 0.0
    %322 = vmatprep.subr.mxu0 0.0
    %323 = vmatpush1.msra.mxu0 0.0
    %324 = vmatprep.subr.mxu0 0.0
    %325 = vmatpush1.msra.mxu0 0.0
    %326 = vmatprep.subr.mxu0 0.0
    %327 = vmatpush1.msra.mxu0 0.0
    %328 = vmatprep.subr.mxu0 0.0
    %329 = vmatpush1.msra.mxu0 0.0
    %330 = vmatprep.subr.mxu0 0.0
    %331 = vmatpush1.msra.mxu0 0.0
    %332 = vmatprep.subr.mxu0 0.0
    %333 = vmatpush1.msra.mxu0 0.0
    %334 = vmatprep.mubr.f32.mxu0 0.0
    %335 = vmatmul.mubr.f32.gmra.mrb[0].mxu0 %v268
    %v336 = vpop.f32.mrb[0].mxu0
    %v337 = vadd.f32 %v264, %v336
    %v338 = vpop.f32.mrb[0].mxu0
    %339 = vdwg.mxu0
    %v340 = vmax.f32 %v337, 0.0
    %v341 = vld [vmem:[#allocation10] sm:$0xff]
    %v342 = vld [vmem:[#allocation10 + $0x8] sm:$0xff]
    %v343 = vld [vmem:[#allocation10 + $0x10] sm:$0xff]
    %v344 = vld [vmem:[#allocation10 + $0x18] sm:$0xff]
    %v345 = vld [vmem:[%s8] sm:$0x1]
    %v347 = vlaneseq
    %v348 = vshrl.u32 %v347, 7
    %v349 = vsub.s32 0, %v348
    %v350 = vrot.slane %v345, %v349
    %v353 = vsel %vm266, %v340, 0
    %355 = vmatprep.subr.mxu0 0.0
    %356 = vmatpush1.msra.mxu0 %v341
    %357 = vmatprep.subr.mxu0 0.0
    %358 = vmatpush1.msra.mxu0 %v342
    %359 = vmatprep.subr.mxu0 0.0
    %360 = vmatpush1.msra.mxu0 %v343
    %361 = vmatprep.subr.mxu0 0.0
    %362 = vmatpush1.msra.mxu0 %v344
    %363 = vmatprep.subr.mxu0 0.0
    %364 = vmatpush1.msra.mxu0 0.0
    %365 = vmatprep.subr.mxu0 0.0
    %366 = vmatpush1.msra.mxu0 0.0
    %367 = vmatprep.subr.mxu0 0.0
    %368 = vmatpush1.msra.mxu0 0.0
    %369 = vmatprep.subr.mxu0 0.0
    %370 = vmatpush1.msra.mxu0 0.0
    %371 = vmatprep.subr.mxu0 0.0
    %372 = vmatpush1.msra.mxu0 0.0
    %373 = vmatprep.subr.mxu0 0.0
    %374 = vmatpush1.msra.mxu0 0.0
    %375 = vmatprep.subr.mxu0 0.0
    %376 = vmatpush1.msra.mxu0 0.0
    %377 = vmatprep.subr.mxu0 0.0
    %378 = vmatpush1.msra.mxu0 0.0
    %379 = vmatprep.subr.mxu0 0.0
    %380 = vmatpush1.msra.mxu0 0.0
    %381 = vmatprep.subr.mxu0 0.0
    %382 = vmatpush1.msra.mxu0 0.0
    %383 = vmatprep.subr.mxu0 0.0
    %384 = vmatpush1.msra.mxu0 0.0
    %385 = vmatprep.subr.mxu0 0.0
    %386 = vmatpush1.msra.mxu0 0.0
    %387 = vmatprep.subr.mxu0 0.0
    %388 = vmatpush1.msra.mxu0 0.0
    %389 = vmatprep.subr.mxu0 0.0
    %390 = vmatpush1.msra.mxu0 0.0
    %391 = vmatprep.subr.mxu0 0.0
    %392 = vmatpush1.msra.mxu0 0.0
    %393 = vmatprep.subr.mxu0 0.0
    %394 = vmatpush1.msra.mxu0 0.0
    %395 = vmatprep.subr.mxu0 0.0
    %396 = vmatpush1.msra.mxu0 0.0
    %397 = vmatprep.subr.mxu0 0.0
    %398 = vmatpush1.msra.mxu0 0.0
    %399 = vmatprep.subr.mxu0 0.0
    %400 = vmatpush1.msra.mxu0 0.0
    %401 = vmatprep.subr.mxu0 0.0
    %402 = vmatpush1.msra.mxu0 0.0
    %403 = vmatprep.subr.mxu0 0.0
    %404 = vmatpush1.msra.mxu0 0.0
    %405 = vmatprep.subr.mxu0 0.0
    %406 = vmatpush1.msra.mxu0 0.0
    %407 = vmatprep.subr.mxu0 0.0
    %408 = vmatpush1.msra.mxu0 0.0
    %409 = vmatprep.subr.mxu0 0.0
    %410 = vmatpush1.msra.mxu0 0.0
    %411 = vmatprep.subr.mxu0 0.0
    %412 = vmatpush1.msra.mxu0 0.0
    %413 = vmatprep.subr.mxu0 0.0
    %414 = vmatpush1.msra.mxu0 0.0
    %415 = vmatprep.subr.mxu0 0.0
    %416 = vmatpush1.msra.mxu0 0.0
    %417 = vmatprep.subr.mxu0 0.0
    %418 = vmatpush1.msra.mxu0 0.0
    %419 = vmatprep.mubr.f32.mxu0 0.0
    %420 = vmatmul.mubr.f32.gmra.mrb[0].mxu0 %v353
    %v421 = vpop.f32.mrb[0].mxu0
    %v422 = vadd.f32 %v350, %v421
    %v423 = vpop.f32.mrb[0].mxu0
    %424 = vdwg.mxu0
    %425 = vst [vmem:[#allocation11] sm:$0xff] %v422
    // Predicated region
    $region58: #{tpu_custom_call.1} parent=1 // pred_check
      _
    $region59: #{tpu_custom_call.1} parent=1 // pred_check_branch
      %427 = sbr.rel (0) target = $region61
    $region60: #{tpu_custom_call.1} parent=1 // pred_region
      %s429 = ssub.s32 128, 128
      %430 = vsyncadd [#allocation4], %s429
      %s432 = sshll.u32 [#allocation11], 4
      %s433 = int_to_ptr.vmem [resolvable:$true] %s432
      %435 = dma.vmem_to_hbm [thread:$0]  %s433, 128, %s9, [#allocation4]
    $region61: #{tpu_custom_call.1} parent=1 // pred_fallthru
      _
    // Predicated region
    $region62: #{tpu_custom_call.1} parent=1 // pred_check
      _
    $region63: #{tpu_custom_call.1} parent=1 // pred_check_branch
      %437 = sbr.rel (0) target = $region65
    $region64: #{tpu_custom_call.1} parent=1 // pred_region
      %438 = dma.done [#allocation4], 128
    $region65: #{tpu_custom_call.1} parent=1 // pred_fallthru
      _
    %439 = vsyncpa [#allocation3], 1
    %440 = vsyncpa [#allocation6], 1
    %441 = vsyncpa [#allocation9], 1
    %442 = vsyncpa [#allocation4], 1

</llo_original>
